<compile_context>
chip_gen: v7x
topology: tpu7x:2x2x1
jax: 0.10.0
libtpu: 0.0.40
codegen_flags: <defaults>
</compile_context>

<pallas_src>
import jax
import jax.numpy as jnp
from jax.experimental import pallas as pl
from jax.experimental.pallas import tpu as pltpu


# ------------------------- Kernel: dense + tanh -------------------------
def pooler_kernel(x_ref, w_ref, b_ref, o_ref):
    # x: [tile_n, H_in], w: [H_in, tile_h] (pre-transposed, bf16), b: [1, tile_h].
    # Natural (M,K)x(K,N) contraction on the MXU with f32 accumulation.
    x = x_ref[...].astype(jnp.bfloat16)
    y = jnp.dot(x, w_ref[...], preferred_element_type=jnp.float32)
    y = y + b_ref[...].astype(jnp.float32)           # bias broadcast, f32
    o_ref[...] = jnp.tanh(y).astype(o_ref.dtype)     # tanh -> EUP slot, f32


def pooled_dense_tanh(x, w_t, b, *, tile_n=256, tile_h=512):
    """x: [N, H_in] f32, w_t: [H_in, H_out] bf16 (pre-transposed), b: [H_out] f32."""
    n, h_in = x.shape
    h_out = w_t.shape[1]
    tile_n = min(tile_n, n)          # small batches: one full-extent row block
    tile_h = min(tile_h, h_out)      # small hidden: one full-extent column slab

    # Outer grid axis = H_out slabs, inner axis = row tiles: each weight slab
    # is DMA'd once and stays resident while the row tiles sweep under it, and
    # slab j+1 prefetches behind slab j's compute.
    grid = (pl.cdiv(h_out, tile_h), pl.cdiv(n, tile_n))

    return pl.pallas_call(
        pooler_kernel,
        out_shape=jax.ShapeDtypeStruct((n, h_out), x.dtype),
        grid_spec=pltpu.PrefetchScalarGridSpec(
            num_scalar_prefetch=0,
            grid=grid,
            in_specs=[
                pl.BlockSpec((tile_n, h_in), lambda j, i: (i, 0)),   # row tile of x
                pl.BlockSpec((h_in, tile_h), lambda j, i: (0, j)),   # W column slab
                pl.BlockSpec((1, tile_h), lambda j, i: (0, j)),      # bias slab
            ],
            out_specs=pl.BlockSpec((tile_n, tile_h), lambda j, i: (i, j)),
        ),
        compiler_params=pltpu.CompilerParams(
            dimension_semantics=("parallel", "parallel")),
    )(x, w_t, b.reshape(1, h_out))


# ---------------------------- Module wrapper ----------------------------
class BertPoolerPallas:
    def __init__(self, hidden_size, key):
        kw, kb = jax.random.split(key, 2)
        init = 0.02
        # PyTorch nn.Linear layout is [H_out, H_in]; transpose ONCE at init to
        # the MXU-natural [H_in, H_out] layout and store the matmul operand in
        # bf16 (bias stays f32 for the f32 epilogue).
        w = init * jax.random.normal(kw, (hidden_size, hidden_size), jnp.float32)
        self.w_t = jnp.asarray(w.T, dtype=jnp.bfloat16)   # [H_in, H_out], bf16
        self.b = init * jax.random.normal(kb, (hidden_size,), jnp.float32)

    def __call__(self, hidden_states):
        # hidden_states: [B, S, H] -> take the [CLS] (first) token.
        # TODO(synk): fuse this [CLS] gather into the kernel via a
        # (tile_n, Squeezed, H) BlockSpec once the size-1 second-minor block
        # layout is validated on the target Mosaic version; it is a tiny
        # [B, H] strided read either way.
        first_token = hidden_states[:, 0, :]              # [B, H]
        return pooled_dense_tanh(first_token, self.w_t, self.b)


# Pure-JAX reference at the kernel's numerics (bf16 matmul operands, f32
# accumulate, f32 bias + tanh).
def reference(module, hidden_states):
    first_token = hidden_states[:, 0, :]
    x = first_token.astype(jnp.bfloat16).astype(jnp.float32)
    w = module.w_t.astype(jnp.float32)
    return jnp.tanh(x @ w + module.b)


if __name__ == "__main__":
    B, S, H = 2, 8, 32  # batch, seq, hidden

    key = jax.random.PRNGKey(0)
    k_param, k_x = jax.random.split(key, 2)

    module = BertPoolerPallas(hidden_size=H, key=k_param)
    hidden_states = jax.random.normal(k_x, (B, S, H), jnp.float32)

    out = module(hidden_states)
    out = jax.block_until_ready(out)

    ref = reference(module, hidden_states)
    assert out.shape == (B, H)
    assert jnp.allclose(out, ref, atol=1e-4, rtol=1e-4), "mismatch vs reference"

    print("KERNEL_OK")
</pallas_src>

<mosaic_0001>
module attributes {stable_mosaic.version = 11 : i64} {
  func.func @pooler_kernel(%arg0: i32, %arg1: i32, %arg2: memref<2x32xf32, #tpu.memory_space<vmem>>, %arg3: memref<32x32xbf16, #tpu.memory_space<vmem>>, %arg4: memref<1x32xf32, #tpu.memory_space<vmem>>, %arg5: memref<2x32xf32, #tpu.memory_space<vmem>>) attributes {dimension_semantics = [#tpu.dimension_semantics<parallel>, #tpu.dimension_semantics<parallel>], iteration_bounds = array<i64: 1, 1>, scalar_prefetch = 0 : i64, scratch_operands = 0 : i64, tpu.core_type = #tpu.core_type<tc>, window_params = [{transform_indices = @transform_0, window_bounds = array<i64: 2, 32>}, {transform_indices = @transform_1, window_bounds = array<i64: 32, 32>}, {transform_indices = @transform_2, window_bounds = array<i64: 1, 32>}, {transform_indices = @transform_3, window_bounds = array<i64: 2, 32>}]} {
    %c0 = arith.constant 0 : index
    %c0_0 = arith.constant 0 : index
    %0 = vector.load %arg2[%c0, %c0_0] : memref<2x32xf32, #tpu.memory_space<vmem>>, vector<2x32xf32>
    %1 = arith.truncf %0 : vector<2x32xf32> to vector<2x32xbf16>
    %c0_1 = arith.constant 0 : index
    %c0_2 = arith.constant 0 : index
    %2 = vector.load %arg3[%c0_1, %c0_2] : memref<32x32xbf16, #tpu.memory_space<vmem>>, vector<32x32xbf16>
    %cst = arith.constant dense<0.000000e+00> : vector<2x32xf32>
    %3 = tpu.matmul %1, %2, %cst {dimension_numbers = #tpu.dot_dimension_numbers<[1], [0], [0], [1], [0, 0, 1, 1], [], []>} : vector<2x32xbf16>, vector<32x32xbf16>, vector<2x32xf32> -> vector<2x32xf32>
    %c0_3 = arith.constant 0 : index
    %c0_4 = arith.constant 0 : index
    %4 = vector.load %arg4[%c0_3, %c0_4] : memref<1x32xf32, #tpu.memory_space<vmem>>, vector<1x32xf32>
    %5 = vector.broadcast %4 : vector<1x32xf32> to vector<2x32xf32>
    %6 = arith.addf %3, %5 : vector<2x32xf32>
    %7 = math.tanh %6 : vector<2x32xf32>
    %c0_5 = arith.constant 0 : index
    %c0_6 = arith.constant 0 : index
    %8 = vector.load %arg5[%c0_5, %c0_6] : memref<2x32xf32, #tpu.memory_space<vmem>>, vector<2x32xf32>
    tpu.vector_store %arg5[%c0_5, %c0_6], %7 {strides = array<i32>} : memref<2x32xf32, #tpu.memory_space<vmem>>, vector<2x32xf32>,
    return
  }
  func.func @transform_0(%arg0: i32, %arg1: i32) -> (i32, i32) {
    %c0_i32 = arith.constant 0 : i32
    %c0_i32_0 = arith.constant 0 : i32
    return %arg1, %c0_i32 : i32, i32
  }
  func.func @transform_1(%arg0: i32, %arg1: i32) -> (i32, i32) {
    %c0_i32 = arith.constant 0 : i32
    %c0_i32_0 = arith.constant 0 : i32
    return %c0_i32, %arg0 : i32, i32
  }
  func.func @transform_2(%arg0: i32, %arg1: i32) -> (i32, i32) {
    %c0_i32 = arith.constant 0 : i32
    %c0_i32_0 = arith.constant 0 : i32
    return %c0_i32, %arg0 : i32, i32
  }
  func.func @transform_3(%arg0: i32, %arg1: i32) -> (i32, i32) {
    %c0_i32 = arith.constant 0 : i32
    return %arg1, %arg0 : i32, i32
  }
}

</mosaic_0001>

<llo_original>
// kernel: tpu_custom_call.1
$region0: #{tpu_custom_call.1}
  #allocation0 [shape = 'u32[]', space=smem, size = 0x4, offset = 0x4, fixed_abs, tag = 'smem constant byte address 0x4 - core index']
  #allocation1 [shape = 'u32[144,128]{1,0:T(1,128)}', space=vmem, size = 0x12000, scoped, tag = 'internal scratch']
  %s0 = inlined_call_operand.hbm [shape: f32[2,32], index: 0, kind: input, shape index: {}]
  %s1 = inlined_call_operand.hbm [shape: bf16[32,32], index: 1, kind: input, shape index: {}]
  %s2 = inlined_call_operand.vmem [shape: f32[1,32], index: 2, kind: input, shape index: {}]
  %s3 = inlined_call_operand.hbm [shape: f32[2,32], index: 3, kind: output, shape index: {}]
  %s4 = sld [smem:[#allocation0]]
  $region30: #{tpu_custom_call.1} parent=0
    _
  %s6 = ssub.s32 1, %s4
  %s7 = scalar_select 0, %s6, %s4
  $region1: #{tpu_custom_call.1} parent=0
    #allocation2 [shape = 'u8[1024]{0}', space=vmem, size = 0x400, scoped, tag = 'input window, operand 0, single buffered']
    #allocation3 [shape = 's32[1]{0}', space=sflag, size = 0x4, scoped, tag = 'scoped memory for tpu_custom_call.1']
    #allocation4 [shape = 's32[1]{0}', space=sflag, size = 0x4, scoped, tag = 'scoped memory for tpu_custom_call.1']
    #allocation5 [shape = 'u8[8192]{0}', space=vmem, size = 0x2000, scoped, tag = 'input window, operand 1, single buffered']
    #allocation6 [shape = 's32[1]{0}', space=sflag, size = 0x4, scoped, tag = 'scoped memory for tpu_custom_call.1']
    #allocation7 [shape = 'u8[1024]{0}', space=vmem, size = 0x400, scoped, tag = 'output window, operand 0, single buffered']
    %8 = vsyncpa [#allocation3], 0
    %9 = vsyncpa [#allocation6], 0
    %10 = vsyncpa [#allocation4], 0
    // Predicated region
    $region2: #{tpu_custom_call.1} parent=1 // pred_check
      _
    $region3: #{tpu_custom_call.1} parent=1 // pred_check_branch
      %12 = sbr.rel (0) target = $region5
    $region4: #{tpu_custom_call.1} parent=1 // pred_region
      %s14 = ssub.s32 32, 32
      %15 = vsyncadd [#allocation3], %s14
      %s17 = sshll.u32 [#allocation2], 4
      %s18 = int_to_ptr.vmem [resolvable:$true] %s17
      %20 = dma.hbm_to_vmem [thread:$0]  %s0, 32, %s18, [#allocation3]
    $region5: #{tpu_custom_call.1} parent=1 // pred_fallthru
      _
    // Predicated region
    $region6: #{tpu_custom_call.1} parent=1 // pred_check
      _
    $region7: #{tpu_custom_call.1} parent=1 // pred_check_branch
      %22 = sbr.rel (0) target = $region9
    $region8: #{tpu_custom_call.1} parent=1 // pred_region
      %s24 = ssub.s32 256, 256
      %25 = vsyncadd [#allocation6], %s24
      %s26 = sshll.u32 [#allocation5], 4
      %s27 = int_to_ptr.vmem [resolvable:$true] %s26
      %32 = dma.hbm_to_vmem [thread:$0]  %s1, 256, %s27, [#allocation6], 64, 64, 4
    $region9: #{tpu_custom_call.1} parent=1 // pred_fallthru
      _
    // Predicated region
    $region10: #{tpu_custom_call.1} parent=1 // pred_check
      _
    $region11: #{tpu_custom_call.1} parent=1 // pred_check_branch
      %34 = sbr.rel (0) target = $region13
    $region12: #{tpu_custom_call.1} parent=1 // pred_region
      _
    $region13: #{tpu_custom_call.1} parent=1 // pred_fallthru
      _
    // Predicated region
    $region14: #{tpu_custom_call.1} parent=1 // pred_check
      _
    $region15: #{tpu_custom_call.1} parent=1 // pred_check_branch
      %36 = sbr.rel (0) target = $region17
    $region16: #{tpu_custom_call.1} parent=1 // pred_region
      %37 = dma.done [#allocation3], 32
    $region17: #{tpu_custom_call.1} parent=1 // pred_fallthru
      _
    // Predicated region
    $region18: #{tpu_custom_call.1} parent=1 // pred_check
      _
    $region19: #{tpu_custom_call.1} parent=1 // pred_check_branch
      %39 = sbr.rel (0) target = $region21
    $region20: #{tpu_custom_call.1} parent=1 // pred_region
      %40 = dma.done [#allocation6], 256
    $region21: #{tpu_custom_call.1} parent=1 // pred_fallthru
      _
    %v42 = vld [vmem:[#allocation2] sm:$0x3]
    %v43 = vpack.c.bf16 %v42, %v42
    %v44 = vld [vmem:[#allocation5] sm:$0xf]
    %v45 = vld [vmem:[#allocation5 + $0x4] sm:$0xf]
    %v46 = vld [vmem:[#allocation5 + $0x8] sm:$0xf]
    %v47 = vld [vmem:[#allocation5 + $0xc] sm:$0xf]
    %v48 = vld [vmem:[%s2] sm:$0x1]
    %v50 = vlaneseq
    %v51 = vshrl.u32 %v50, 7
    %v52 = vsub.s32 0, %v51
    %v53 = vrot.slane %v48, %v52
    %v59 = vunpack.c.l.b16 %v44
    %v60 = vunpack.c.l.b16 %v45
    %v61 = vunpack.c.l.b16 %v46
    %v62 = vunpack.c.l.b16 %v47
    %v63 = vpack.c.b16 %v60, %v59
    %v64 = vpack.c.b16 %v62, %v61
    %vm67 = vcmask 261120
    %v69 = vsel %vm67, %v43, 0
    %71 = vmatprep.subr.bf16.mxu0 0
    %72 = vmatpush1.bf16.msra.mxu0 %v63
    %73 = vmatprep.subr.bf16.mxu0 0
    %74 = vmatpush1.bf16.msra.mxu0 %v64
    %75 = vmatprep.subr.bf16.mxu0 0
    %76 = vmatpush1.bf16.msra.mxu0 0
    %77 = vmatprep.subr.bf16.mxu0 0
    %78 = vmatpush1.bf16.msra.mxu0 0
    %79 = vmatprep.subr.bf16.mxu0 0
    %80 = vmatpush1.bf16.msra.mxu0 0
    %81 = vmatprep.subr.bf16.mxu0 0
    %82 = vmatpush1.bf16.msra.mxu0 0
    %83 = vmatprep.subr.bf16.mxu0 0
    %84 = vmatpush1.bf16.msra.mxu0 0
    %85 = vmatprep.subr.bf16.mxu0 0
    %86 = vmatpush1.bf16.msra.mxu0 0
    %87 = vmatprep.subr.bf16.mxu0 0
    %88 = vmatpush1.bf16.msra.mxu0 0
    %89 = vmatprep.subr.bf16.mxu0 0
    %90 = vmatpush1.bf16.msra.mxu0 0
    %91 = vmatprep.subr.bf16.mxu0 0
    %92 = vmatpush1.bf16.msra.mxu0 0
    %93 = vmatprep.subr.bf16.mxu0 0
    %94 = vmatpush1.bf16.msra.mxu0 0
    %95 = vmatprep.subr.bf16.mxu0 0
    %96 = vmatpush1.bf16.msra.mxu0 0
    %97 = vmatprep.subr.bf16.mxu0 0
    %98 = vmatpush1.bf16.msra.mxu0 0
    %99 = vmatprep.subr.bf16.mxu0 0
    %100 = vmatpush1.bf16.msra.mxu0 0
    %101 = vmatprep.subr.bf16.mxu0 0
    %102 = vmatpush1.bf16.msra.mxu0 0
    %103 = vmatprep.mubr.bf16.mxu0 0
    %104 = vmatmul.mubr.bf16.gmra.mrb[0].mxu0 %v69
    %v105 = vpop.f32.mrb[0].mxu0
    %v106 = vadd.f32 %v53, %v105
    %v107 = vpop.f32.mrb[0].mxu0
    %v108 = vpop.f32.mrb[0].mxu0
    %v109 = vpop.f32.mrb[0].mxu0
    %110 = vdwg.mxu0
    %v111 = vtanh.pop %v106
    %vm112 = vcmask 254976
    %113 = vst.msk [vmem:[#allocation7] sm:$0x3] %vm112, %v111
    // Predicated region
    $region22: #{tpu_custom_call.1} parent=1 // pred_check
      _
    $region23: #{tpu_custom_call.1} parent=1 // pred_check_branch
      %115 = sbr.rel (0) target = $region25
    $region24: #{tpu_custom_call.1} parent=1 // pred_region
      %s117 = ssub.s32 32, 32
      %118 = vsyncadd [#allocation4], %s117
      %s120 = sshll.u32 [#allocation7], 4
      %s121 = int_to_ptr.vmem [resolvable:$true] %s120
      %123 = dma.vmem_to_hbm [thread:$0]  %s121, 32, %s3, [#allocation4]
    $region25: #{tpu_custom_call.1} parent=1 // pred_fallthru
      _
    // Predicated region
    $region26: #{tpu_custom_call.1} parent=1 // pred_check
      _
    $region27: #{tpu_custom_call.1} parent=1 // pred_check_branch
      %125 = sbr.rel (0) target = $region29
    $region28: #{tpu_custom_call.1} parent=1 // pred_region
      %126 = dma.done [#allocation4], 32
    $region29: #{tpu_custom_call.1} parent=1 // pred_fallthru
      _
    %127 = vsyncpa [#allocation3], 1
    %128 = vsyncpa [#allocation6], 1
    %129 = vsyncpa [#allocation4], 1

</llo_original>
